<compile_context>
chip_gen: v5e
topology: v5e:2x2
jax: 0.10.0
libtpu: 0.0.40
codegen_flags: <defaults>
</compile_context>

<pallas_src>
import math
import functools

import jax
import jax.numpy as jnp
from jax import lax
from jax.experimental import pallas as pl
from jax.experimental.pallas import tpu as pltpu


def _encoder_kernel(x_ref, w_ref, p_ref, out_ref, *, num_heads, k_row, v_row):
    f32 = jnp.float32
    bf16 = jnp.bfloat16

    B, L, D = out_ref.shape
    H = num_heads
    Dh = D // H
    BL = B * L
    R = H * BL                      # rows once the head axis is moved onto the sublane axis

    x = x_ref[...]                                          # (n_src*BL, D) f32, [q;k;v] rows
    xb = x.astype(bf16)

    # ---- fused QKV projection: ONE MXU matmul for q, k and v of every row -----------------
    w_qkv = w_ref[0:D, 0:3 * D]                             # (D, 3D) bf16 (scale folded in q cols)
    proj = jnp.dot(xb, w_qkv, preferred_element_type=f32)   # (n_src*BL, 3D) f32

    # diagonal blocks: q rows x q cols, k rows x k cols, v rows x v cols.
    qp = proj[0:BL, 0:D] + p_ref[0:1, 0:D]                               # (BL, D), pre-scaled
    kp = proj[k_row:k_row + BL, D:2 * D] + p_ref[1:2, 0:D]               # (BL, D)
    vp = proj[v_row:v_row + BL, 2 * D:3 * D] + p_ref[2:3, 0:D]           # (BL, D)

    # ---- all heads, all batches with ONE score matmul + ONE pv matmul ----------------------
    # Rows are replicated H times (row order (h, b, l)); lane_mask zeroes the lanes that do
    # not belong to the row's own head on the K/V side, so the D-wide contraction reduces to
    # the per-head Dh-wide contraction.  score_mask (-1e30 off the (h, b) diagonal blocks)
    # restricts the softmax to each row's own batch & head.
    lane_mask = p_ref[8 + R:8 + 2 * R, 0:D]                 # (R, D)   0 / 1
    score_mask = p_ref[8:8 + R, 0:R]                        # (R, R)   0 / -1e30 (additive)

    q_h = jnp.broadcast_to(qp[None], (H, BL, D)).reshape(R, D)
    k_h = jnp.broadcast_to(kp[None], (H, BL, D)).reshape(R, D) * lane_mask
    v_h = jnp.broadcast_to(vp[None], (H, BL, D)).reshape(R, D) * lane_mask

    s = jnp.einsum('qd,kd->qk', q_h.astype(bf16), k_h.astype(bf16),
                   preferred_element_type=f32) + score_mask                  # (R, R)
    s = s - jnp.max(s, axis=-1, keepdims=True)
    p = jnp.exp(s)
    p = p * pl.reciprocal(jnp.sum(p, axis=-1, keepdims=True), approx=True)   # EUP reciprocal

    ctx = jnp.dot(p.astype(bf16), v_h.astype(bf16), preferred_element_type=f32)   # (R, D)
    # Each row group h only has its own head's lanes non-zero -> head concat == sum over h.
    heads = jnp.sum(ctx.reshape(H, BL, D), axis=0)                                  # (BL, D)

    # ---- output projection + residual 1 ------------------------------------------------------
    wo = w_ref[D:2 * D, 0:D]
    attn = jnp.dot(heads.astype(bf16), wo, preferred_element_type=f32) + p_ref[3:4, 0:D]
    x1 = attn + x[0:BL, 0:D]                     # attn_dropout = identity in eval

    # ---- feed-forward -------------------------------------------------------------------------
    w1 = w_ref[2 * D:3 * D, 0:2 * D]
    w2 = w_ref[3 * D:5 * D, 0:D]
    h1 = jnp.dot(x1.astype(bf16), w1, preferred_element_type=f32) + p_ref[4:5, 0:2 * D]
    # tanh-approx GELU: EUP tanh instead of a long f32 VALU erf polynomial (~1e-3 deviation).
    c = math.sqrt(2.0 / math.pi)
    h1 = 0.5 * h1 * (1.0 + jnp.tanh(c * (h1 + 0.044715 * (h1 * h1 * h1))))
    h2 = jnp.dot(h1.astype(bf16), w2, preferred_element_type=f32) + p_ref[5:6, 0:D]
    x2 = h2 + x1                                 # fn_dropout = identity in eval

    # ---- LayerNorm over the feature dim (eps = 1e-5, torch default), all f32 -------------------
    mean = jnp.mean(x2, axis=-1, keepdims=True)
    var = jnp.mean((x2 - mean) ** 2, axis=-1, keepdims=True)
    xn = (x2 - mean) * lax.rsqrt(var + 1e-5)
    out = xn * p_ref[6:7, 0:D] + p_ref[7:8, 0:D]

    out_ref[...] = out.reshape(B, L, D).astype(out_ref.dtype)


def encoder_forward(q, k, v, params, num_heads):
    B, L, D = q.shape
    H = num_heads
    Dh = D // H
    BL = B * L
    R = H * BL
    f32, bf16 = jnp.float32, jnp.bfloat16
    scale = 1.0 / math.sqrt(Dh)

    # ---- ONE bf16 weight slab (pre-transposed; attention scale folded into the q columns).
    # In a real deployment this packing is done once, not per call.
    w_in = params["w_in"]                                   # (3D, D) = [Wq; Wk; Wv]
    w_qkv_t = jnp.concatenate(
        [w_in[0:D].T * scale, w_in[D:2 * D].T, w_in[2 * D:3 * D].T], axis=1)     # (D, 3D)
    w_slab = jnp.zeros((5 * D, 3 * D), bf16)
    w_slab = w_slab.at[0:D, 0:3 * D].set(w_qkv_t.astype(bf16))
    w_slab = w_slab.at[D:2 * D, 0:D].set(params["wo"].T.astype(bf16))
    w_slab = w_slab.at[2 * D:3 * D, 0:2 * D].set(params["w1"].T.astype(bf16))
    w_slab = w_slab.at[3 * D:5 * D, 0:D].set(params["w2"].T.astype(bf16))

    # ---- ONE f32 slab: biases + LayerNorm affine + the two static attention masks.
    Wlanes = max(2 * D, R)
    b_in = params["b_in"].reshape(3 * D)
    row_ids = jnp.arange(R)
    grp = row_ids // L                                               # (head, batch) group id
    smask = jnp.where(grp[:, None] == grp[None, :], 0.0, -1e30).astype(f32)        # (R, R)
    lmask = (row_ids[:, None] // BL == jnp.arange(D)[None, :] // Dh).astype(f32)   # (R, D)

    p_slab = jnp.zeros((8 + 2 * R, Wlanes), f32)
    p_slab = p_slab.at[0, 0:D].set(b_in[0:D] * scale)                # q bias (scale folded)
    p_slab = p_slab.at[1, 0:D].set(b_in[D:2 * D])                    # k bias
    p_slab = p_slab.at[2, 0:D].set(b_in[2 * D:3 * D])                # v bias
    p_slab = p_slab.at[3, 0:D].set(params["bo"].reshape(D))          # out_proj bias
    p_slab = p_slab.at[4, 0:2 * D].set(params["b1"].reshape(2 * D))  # ffn bias 1
    p_slab = p_slab.at[5, 0:D].set(params["b2"].reshape(D))          # ffn bias 2
    p_slab = p_slab.at[6, 0:D].set(params["gamma"].reshape(D))       # LN weight
    p_slab = p_slab.at[7, 0:D].set(params["beta"].reshape(D))        # LN bias
    p_slab = p_slab.at[8:8 + R, 0:R].set(smask)
    p_slab = p_slab.at[8 + R:8 + 2 * R, 0:D].set(lmask)

    # ---- pack q/k/v rows into a single input (self-attention fast path reuses one block).
    if q is k and k is v:
        x_in = q.reshape(BL, D)
        k_row = v_row = 0
    else:
        x_in = jnp.concatenate(
            [q.reshape(BL, D), k.reshape(BL, D), v.reshape(BL, D)], axis=0)       # (3BL, D)
        k_row, v_row = BL, 2 * BL

    kernel = functools.partial(_encoder_kernel, num_heads=H, k_row=k_row, v_row=v_row)
    return pl.pallas_call(
        kernel,
        out_shape=jax.ShapeDtypeStruct((B, L, D), jnp.float32),
        grid=(1,),                 # whole problem fits trivially in VMEM on v5e/v6e/v7x
        in_specs=[pl.BlockSpec(x_in.shape, lambda i: (0, 0)),
                  pl.BlockSpec(w_slab.shape, lambda i: (0, 0)),
                  pl.BlockSpec(p_slab.shape, lambda i: (0, 0))],
        out_specs=pl.BlockSpec((B, L, D), lambda i: (0, 0, 0)),
        compiler_params=pltpu.CompilerParams(dimension_semantics=("arbitrary",)),
    )(x_in, w_slab, p_slab)


def encoder_reference(q, k, v, params, num_heads):
    """Pure-JAX f32 reference matching PyTorch nn.MultiheadAttention eval forward."""
    B, L, D = q.shape
    H = num_heads
    Dh = D // H
    w_in, b_in = params["w_in"], params["b_in"][0]
    qp = q @ w_in[:D].T + b_in[:D]
    kp = k @ w_in[D:2 * D].T + b_in[D:2 * D]
    vp = v @ w_in[2 * D:].T + b_in[2 * D:]

    def split(x):
        return x.reshape(B, L, H, Dh).transpose(0, 2, 1, 3)   # (B, H, L, Dh)

    qh, kh, vh = split(qp), split(kp), split(vp)
    scores = jnp.einsum("bhqd,bhkd->bhqk", qh, kh) / math.sqrt(Dh)
    p = jax.nn.softmax(scores, axis=-1)
    heads = jnp.einsum("bhqk,bhkd->bhqd", p, vh)
    attn = heads.transpose(0, 2, 1, 3).reshape(B, L, D)
    attn = attn @ params["wo"].T + params["bo"][0]
    x = attn + q
    residual = x
    h1 = x @ params["w1"].T + params["b1"][0]
    h1 = 0.5 * h1 * (1.0 + lax.erf(h1 / math.sqrt(2.0)))      # exact-erf GELU (torch default)
    h2 = h1 @ params["w2"].T + params["b2"][0]
    x = h2 + residual
    mean = jnp.mean(x, axis=-1, keepdims=True)
    var = jnp.mean((x - mean) ** 2, axis=-1, keepdims=True)
    xn = (x - mean) * lax.rsqrt(var + 1e-5)
    return xn * params["gamma"][0] + params["beta"][0]


def make_params(key, feature_dim):
    D = feature_dim
    ks = jax.random.split(key, 8)
    s = 0.05
    return {
        "w_in": jax.random.normal(ks[0], (3 * D, D), jnp.float32) * s,   # in_proj_weight
        "b_in": jax.random.normal(ks[1], (1, 3 * D), jnp.float32) * s,   # in_proj_bias
        "wo":   jax.random.normal(ks[2], (D, D), jnp.float32) * s,       # out_proj.weight
        "bo":   jax.random.normal(ks[3], (1, D), jnp.float32) * s,       # out_proj.bias
        "w1":   jax.random.normal(ks[4], (2 * D, D), jnp.float32) * s,   # feed_forward[0]
        "b1":   jax.random.normal(ks[5], (1, 2 * D), jnp.float32) * s,
        "w2":   jax.random.normal(ks[6], (D, 2 * D), jnp.float32) * s,   # feed_forward[3]
        "b2":   jax.random.normal(ks[7], (1, D), jnp.float32) * s,
        "gamma": jnp.ones((1, D), jnp.float32),                          # layer_norm_output.weight
        "beta":  jnp.zeros((1, D), jnp.float32),                         # layer_norm_output.bias
    }


if __name__ == "__main__":
    B, L, D, H = 2, 8, 32, 4   # batch, seq, feature_dim, heads
    key = jax.random.PRNGKey(0)
    kq, kk, kv, kp = jax.random.split(key, 4)
    q = jax.random.normal(kq, (B, L, D), jnp.float32)
    k = jax.random.normal(kk, (B, L, D), jnp.float32)
    v = jax.random.normal(kv, (B, L, D), jnp.float32)
    params = make_params(kp, D)

    out = encoder_forward(q, k, v, params, num_heads=H)
    out = jax.block_until_ready(out)

    ref = encoder_reference(q, k, v, params, num_heads=H)
    assert out.shape == (B, L, D)
    # bf16 MXU operands, approx softmax reciprocal and tanh-approx GELU vs. the exact f32
    # reference -> compare with a correspondingly loose tolerance.
    assert jnp.allclose(out, ref, atol=2e-2, rtol=2e-2), "mismatch vs JAX reference"

    print("KERNEL_OK")
</pallas_src>

<mosaic_0001>
module attributes {stable_mosaic.version = 11 : i64} {
  func.func @_encoder_kernel(%arg0: i32, %arg1: memref<48x32xf32, #tpu.memory_space<vmem>>, %arg2: memref<160x96xbf16, #tpu.memory_space<vmem>>, %arg3: memref<136x64xf32, #tpu.memory_space<vmem>>, %arg4: memref<2x8x32xf32, #tpu.memory_space<vmem>>) attributes {dimension_semantics = [#tpu.dimension_semantics<arbitrary>], iteration_bounds = array<i64: 1>, scalar_prefetch = 0 : i64, scratch_operands = 0 : i64, tpu.core_type = #tpu.core_type<tc>, window_params = [{pipeline_mode = #tpu.pipeline_mode<synchronous>, transform_indices = @transform_0, window_bounds = array<i64: 48, 32>}, {pipeline_mode = #tpu.pipeline_mode<synchronous>, transform_indices = @transform_1, window_bounds = array<i64: 160, 96>}, {pipeline_mode = #tpu.pipeline_mode<synchronous>, transform_indices = @transform_2, window_bounds = array<i64: 136, 64>}, {pipeline_mode = #tpu.pipeline_mode<synchronous>, transform_indices = @transform_3, window_bounds = array<i64: 2, 8, 32>}]} {
    %c0 = arith.constant 0 : index
    %c0_0 = arith.constant 0 : index
    %0 = vector.load %arg1[%c0, %c0_0] : memref<48x32xf32, #tpu.memory_space<vmem>>, vector<48x32xf32>
    %1 = arith.truncf %0 : vector<48x32xf32> to vector<48x32xbf16>
    %c0_1 = arith.constant 0 : index
    %c0_2 = arith.constant 0 : index
    %2 = vector.load %arg2[%c0_1, %c0_2] : memref<160x96xbf16, #tpu.memory_space<vmem>>, vector<32x96xbf16>
    %cst = arith.constant dense<0.000000e+00> : vector<48x96xf32>
    %3 = tpu.matmul %1, %2, %cst {dimension_numbers = #tpu.dot_dimension_numbers<[1], [0], [0], [1], [0, 0, 1, 1], [], []>} : vector<48x32xbf16>, vector<32x96xbf16>, vector<48x96xf32> -> vector<48x96xf32>
    %4 = vector.extract_strided_slice %3 {offsets = [0, 0], sizes = [16, 32], strides = [1, 1]} : vector<48x96xf32> to vector<16x32xf32>
    %c0_3 = arith.constant 0 : index
    %c0_4 = arith.constant 0 : index
    %5 = vector.load %arg3[%c0_3, %c0_4] : memref<136x64xf32, #tpu.memory_space<vmem>>, vector<1x32xf32>
    %6 = vector.broadcast %5 : vector<1x32xf32> to vector<16x32xf32>
    %7 = arith.addf %4, %6 : vector<16x32xf32>
    %8 = vector.extract_strided_slice %3 {offsets = [16, 32], sizes = [16, 32], strides = [1, 1]} : vector<48x96xf32> to vector<16x32xf32>
    %c1 = arith.constant 1 : index
    %c0_5 = arith.constant 0 : index
    %9 = vector.load %arg3[%c1, %c0_5] : memref<136x64xf32, #tpu.memory_space<vmem>>, vector<1x32xf32>
    %10 = vector.broadcast %9 : vector<1x32xf32> to vector<16x32xf32>
    %11 = arith.addf %8, %10 : vector<16x32xf32>
    %12 = vector.extract_strided_slice %3 {offsets = [32, 64], sizes = [16, 32], strides = [1, 1]} : vector<48x96xf32> to vector<16x32xf32>
    %c2 = arith.constant 2 : index
    %c0_6 = arith.constant 0 : index
    %13 = vector.load %arg3[%c2, %c0_6] : memref<136x64xf32, #tpu.memory_space<vmem>>, vector<1x32xf32>
    %14 = vector.broadcast %13 : vector<1x32xf32> to vector<16x32xf32>
    %15 = arith.addf %12, %14 : vector<16x32xf32>
    %c72 = arith.constant 72 : index
    %c0_7 = arith.constant 0 : index
    %16 = vector.load %arg3[%c72, %c0_7] : memref<136x64xf32, #tpu.memory_space<vmem>>, vector<64x32xf32>
    %c8 = arith.constant 8 : index
    %c0_8 = arith.constant 0 : index
    %17 = vector.load %arg3[%c8, %c0_8] : memref<136x64xf32, #tpu.memory_space<vmem>>, vector<64x64xf32>
    %18 = vector.shape_cast %7 : vector<16x32xf32> to vector<1x16x32xf32>
    %19 = vector.shape_cast %18 : vector<1x16x32xf32> to vector<1x16x32xf32>
    %20 = vector.broadcast %19 : vector<1x16x32xf32> to vector<4x16x32xf32>
    %21 = vector.shape_cast %20 : vector<4x16x32xf32> to vector<64x32xf32>
    %22 = vector.shape_cast %11 : vector<16x32xf32> to vector<1x16x32xf32>
    %23 = vector.shape_cast %22 : vector<1x16x32xf32> to vector<1x16x32xf32>
    %24 = vector.broadcast %23 : vector<1x16x32xf32> to vector<4x16x32xf32>
    %25 = vector.shape_cast %24 : vector<4x16x32xf32> to vector<64x32xf32>
    %26 = arith.mulf %25, %16 : vector<64x32xf32>
    %27 = vector.shape_cast %15 : vector<16x32xf32> to vector<1x16x32xf32>
    %28 = vector.shape_cast %27 : vector<1x16x32xf32> to vector<1x16x32xf32>
    %29 = vector.broadcast %28 : vector<1x16x32xf32> to vector<4x16x32xf32>
    %30 = vector.shape_cast %29 : vector<4x16x32xf32> to vector<64x32xf32>
    %31 = arith.mulf %30, %16 : vector<64x32xf32>
    %32 = arith.truncf %21 : vector<64x32xf32> to vector<64x32xbf16>
    %33 = arith.truncf %26 : vector<64x32xf32> to vector<64x32xbf16>
    "tpu.trace_start"() <{level = 10 : i32, message = "qd,kd->qk"}> : () -> ()
    %cst_9 = arith.constant dense<0.000000e+00> : vector<64x64xf32>
    %34 = tpu.matmul %32, %33, %cst_9 {dimension_numbers = #tpu.dot_dimension_numbers<[1], [1], [0], [0], [0, 0, 1, 0], [], []>} : vector<64x32xbf16>, vector<64x32xbf16>, vector<64x64xf32> -> vector<64x64xf32>
    "tpu.trace_stop"() : () -> ()
    %35 = arith.addf %34, %17 : vector<64x64xf32>
    %cst_10 = arith.constant dense<0xFF800000> : vector<64xf32>
    %36 = vector.multi_reduction <maximumf>, %35, %cst_10 [1] : vector<64x64xf32> to vector<64xf32>
    %37 = vector.shape_cast %36 : vector<64xf32> to vector<64x1xf32>
    %38 = vector.broadcast %37 : vector<64x1xf32> to vector<64x64xf32>
    %39 = arith.subf %35, %38 : vector<64x64xf32>
    %40 = math.exp %39 : vector<64x64xf32>
    %cst_11 = arith.constant dense<0.000000e+00> : vector<64xf32>
    %41 = vector.multi_reduction <add>, %40, %cst_11 [1] : vector<64x64xf32> to vector<64xf32>
    %42 = vector.shape_cast %41 : vector<64xf32> to vector<64x1xf32>
    %43 = tpu.reciprocal %42 {approx = true} : vector<64x1xf32> -> vector<64x1xf32>
    %44 = vector.broadcast %43 : vector<64x1xf32> to vector<64x64xf32>
    %45 = arith.mulf %40, %44 : vector<64x64xf32>
    %46 = arith.truncf %45 : vector<64x64xf32> to vector<64x64xbf16>
    %47 = arith.truncf %31 : vector<64x32xf32> to vector<64x32xbf16>
    %cst_12 = arith.constant dense<0.000000e+00> : vector<64x32xf32>
    %48 = tpu.matmul %46, %47, %cst_12 {dimension_numbers = #tpu.dot_dimension_numbers<[1], [0], [0], [1], [0, 0, 1, 1], [], []>} : vector<64x64xbf16>, vector<64x32xbf16>, vector<64x32xf32> -> vector<64x32xf32>
    %49 = vector.shape_cast %48 : vector<64x32xf32> to vector<4x16x32xf32>
    %cst_13 = arith.constant dense<0.000000e+00> : vector<16x32xf32>
    %50 = vector.multi_reduction <add>, %49, %cst_13 [0] : vector<4x16x32xf32> to vector<16x32xf32>
    %c32 = arith.constant 32 : index
    %c0_14 = arith.constant 0 : index
    %51 = vector.load %arg2[%c32, %c0_14] : memref<160x96xbf16, #tpu.memory_space<vmem>>, vector<32x32xbf16>
    %52 = arith.truncf %50 : vector<16x32xf32> to vector<16x32xbf16>
    %cst_15 = arith.constant dense<0.000000e+00> : vector<16x32xf32>
    %53 = tpu.matmul %52, %51, %cst_15 {dimension_numbers = #tpu.dot_dimension_numbers<[1], [0], [0], [1], [0, 0, 1, 1], [], []>} : vector<16x32xbf16>, vector<32x32xbf16>, vector<16x32xf32> -> vector<16x32xf32>
    %c3 = arith.constant 3 : index
    %c0_16 = arith.constant 0 : index
    %54 = vector.load %arg3[%c3, %c0_16] : memref<136x64xf32, #tpu.memory_space<vmem>>, vector<1x32xf32>
    %55 = vector.broadcast %54 : vector<1x32xf32> to vector<16x32xf32>
    %56 = arith.addf %53, %55 : vector<16x32xf32>
    %57 = vector.extract_strided_slice %0 {offsets = [0, 0], sizes = [16, 32], strides = [1, 1]} : vector<48x32xf32> to vector<16x32xf32>
    %58 = arith.addf %56, %57 : vector<16x32xf32>
    %c64 = arith.constant 64 : index
    %c0_17 = arith.constant 0 : index
    %59 = vector.load %arg2[%c64, %c0_17] : memref<160x96xbf16, #tpu.memory_space<vmem>>, vector<32x64xbf16>
    %c96 = arith.constant 96 : index
    %c0_18 = arith.constant 0 : index
    %60 = vector.load %arg2[%c96, %c0_18] : memref<160x96xbf16, #tpu.memory_space<vmem>>, vector<64x32xbf16>
    %61 = arith.truncf %58 : vector<16x32xf32> to vector<16x32xbf16>
    %cst_19 = arith.constant dense<0.000000e+00> : vector<16x64xf32>
    %62 = tpu.matmul %61, %59, %cst_19 {dimension_numbers = #tpu.dot_dimension_numbers<[1], [0], [0], [1], [0, 0, 1, 1], [], []>} : vector<16x32xbf16>, vector<32x64xbf16>, vector<16x64xf32> -> vector<16x64xf32>
    %c4 = arith.constant 4 : index
    %c0_20 = arith.constant 0 : index
    %63 = vector.load %arg3[%c4, %c0_20] : memref<136x64xf32, #tpu.memory_space<vmem>>, vector<1x64xf32>
    %64 = vector.broadcast %63 : vector<1x64xf32> to vector<16x64xf32>
    %65 = arith.addf %62, %64 : vector<16x64xf32>
    %cst_21 = arith.constant 5.000000e-01 : f32
    %66 = vector.broadcast %cst_21 : f32 to vector<16x64xf32>
    %67 = arith.mulf %66, %65 : vector<16x64xf32>
    %68 = arith.mulf %65, %65 : vector<16x64xf32>
    %69 = arith.mulf %68, %65 : vector<16x64xf32>
    %cst_22 = arith.constant 4.471500e-02 : f32
    %70 = vector.broadcast %cst_22 : f32 to vector<16x64xf32>
    %71 = arith.mulf %70, %69 : vector<16x64xf32>
    %72 = arith.addf %65, %71 : vector<16x64xf32>
    %cst_23 = arith.constant 0.797884583 : f32
    %73 = vector.broadcast %cst_23 : f32 to vector<16x64xf32>
    %74 = arith.mulf %73, %72 : vector<16x64xf32>
    %75 = math.tanh %74 : vector<16x64xf32>
    %cst_24 = arith.constant 1.000000e+00 : f32
    %76 = vector.broadcast %cst_24 : f32 to vector<16x64xf32>
    %77 = arith.addf %76, %75 : vector<16x64xf32>
    %78 = arith.mulf %67, %77 : vector<16x64xf32>
    %79 = arith.truncf %78 : vector<16x64xf32> to vector<16x64xbf16>
    %cst_25 = arith.constant dense<0.000000e+00> : vector<16x32xf32>
    %80 = tpu.matmul %79, %60, %cst_25 {dimension_numbers = #tpu.dot_dimension_numbers<[1], [0], [0], [1], [0, 0, 1, 1], [], []>} : vector<16x64xbf16>, vector<64x32xbf16>, vector<16x32xf32> -> vector<16x32xf32>
    %c5 = arith.constant 5 : index
    %c0_26 = arith.constant 0 : index
    %81 = vector.load %arg3[%c5, %c0_26] : memref<136x64xf32, #tpu.memory_space<vmem>>, vector<1x32xf32>
    %82 = vector.broadcast %81 : vector<1x32xf32> to vector<16x32xf32>
    %83 = arith.addf %80, %82 : vector<16x32xf32>
    %84 = arith.addf %83, %58 : vector<16x32xf32>
    %cst_27 = arith.constant dense<0.000000e+00> : vector<16xf32>
    %85 = vector.multi_reduction <add>, %84, %cst_27 [1] : vector<16x32xf32> to vector<16xf32>
    %86 = vector.shape_cast %85 : vector<16xf32> to vector<16x1xf32>
    %cst_28 = arith.constant 3.200000e+01 : f32
    %87 = vector.broadcast %cst_28 : f32 to vector<16x1xf32>
    %88 = arith.divf %86, %87 : vector<16x1xf32>
    %89 = vector.broadcast %88 : vector<16x1xf32> to vector<16x32xf32>
    %90 = arith.subf %84, %89 : vector<16x32xf32>
    %91 = arith.mulf %90, %90 : vector<16x32xf32>
    %cst_29 = arith.constant dense<0.000000e+00> : vector<16xf32>
    %92 = vector.multi_reduction <add>, %91, %cst_29 [1] : vector<16x32xf32> to vector<16xf32>
    %93 = vector.shape_cast %92 : vector<16xf32> to vector<16x1xf32>
    %cst_30 = arith.constant 3.200000e+01 : f32
    %94 = vector.broadcast %cst_30 : f32 to vector<16x1xf32>
    %95 = arith.divf %93, %94 : vector<16x1xf32>
    %96 = vector.broadcast %88 : vector<16x1xf32> to vector<16x32xf32>
    %97 = arith.subf %84, %96 : vector<16x32xf32>
    %cst_31 = arith.constant 9.99999974E-6 : f32
    %98 = vector.broadcast %cst_31 : f32 to vector<16x1xf32>
    %99 = arith.addf %95, %98 : vector<16x1xf32>
    %100 = math.rsqrt %99 : vector<16x1xf32>
    %101 = vector.broadcast %100 : vector<16x1xf32> to vector<16x32xf32>
    %102 = arith.mulf %97, %101 : vector<16x32xf32>
    %c6 = arith.constant 6 : index
    %c0_32 = arith.constant 0 : index
    %103 = vector.load %arg3[%c6, %c0_32] : memref<136x64xf32, #tpu.memory_space<vmem>>, vector<1x32xf32>
    %104 = vector.broadcast %103 : vector<1x32xf32> to vector<16x32xf32>
    %105 = arith.mulf %102, %104 : vector<16x32xf32>
    %c7 = arith.constant 7 : index
    %c0_33 = arith.constant 0 : index
    %106 = vector.load %arg3[%c7, %c0_33] : memref<136x64xf32, #tpu.memory_space<vmem>>, vector<1x32xf32>
    %107 = vector.broadcast %106 : vector<1x32xf32> to vector<16x32xf32>
    %108 = arith.addf %105, %107 : vector<16x32xf32>
    %109 = vector.shape_cast %108 : vector<16x32xf32> to vector<2x8x32xf32>
    %c0_34 = arith.constant 0 : index
    %c0_35 = arith.constant 0 : index
    %c0_36 = arith.constant 0 : index
    %110 = vector.load %arg4[%c0_34, %c0_35, %c0_36] : memref<2x8x32xf32, #tpu.memory_space<vmem>>, vector<2x8x32xf32>
    tpu.vector_store %arg4[%c0_34, %c0_35, %c0_36], %109 {strides = array<i32>} : memref<2x8x32xf32, #tpu.memory_space<vmem>>, vector<2x8x32xf32>,
    return
  }
  func.func @transform_0(%arg0: i32) -> (i32, i32) {
    %c0_i32 = arith.constant 0 : i32
    %c0_i32_0 = arith.constant 0 : i32
    %c0_i32_1 = arith.constant 0 : i32
    return %c0_i32, %c0_i32_0 : i32, i32
  }
  func.func @transform_1(%arg0: i32) -> (i32, i32) {
    %c0_i32 = arith.constant 0 : i32
    %c0_i32_0 = arith.constant 0 : i32
    %c0_i32_1 = arith.constant 0 : i32
    return %c0_i32, %c0_i32_0 : i32, i32
  }
  func.func @transform_2(%arg0: i32) -> (i32, i32) {
    %c0_i32 = arith.constant 0 : i32
    %c0_i32_0 = arith.constant 0 : i32
    %c0_i32_1 = arith.constant 0 : i32
    return %c0_i32, %c0_i32_0 : i32, i32
  }
  func.func @transform_3(%arg0: i32) -> (i32, i32, i32) {
    %c0_i32 = arith.constant 0 : i32
    %c0_i32_0 = arith.constant 0 : i32
    %c0_i32_1 = arith.constant 0 : i32
    %c0_i32_2 = arith.constant 0 : i32
    return %c0_i32, %c0_i32_0, %c0_i32_1 : i32, i32, i32
  }
}

</mosaic_0001>

<llo_original>
// kernel: tpu_custom_call.1
$region0: #{tpu_custom_call.1}
  #allocation0 [shape = 'u32[]', space=smem, size = 0x4, offset = 0x4, fixed_abs, tag = 'smem constant byte address 0x4 - core index']
  #allocation1 [shape = 'u32[72,128]{1,0:T(1,128)}', space=vmem, size = 0x9000, scoped, tag = 'internal scratch']
  %s0 = inlined_call_operand.vmem [shape: f32[48,32], index: 0, kind: input, shape index: {}]
  %s1 = inlined_call_operand.vmem [shape: bf16[160,96], index: 1, kind: input, shape index: {}]
  %s2 = inlined_call_operand.vmem [shape: f32[136,64], index: 2, kind: input, shape index: {}]
  %s3 = inlined_call_operand.hbm [shape: f32[2,8,32], index: 3, kind: output, shape index: {}]
  %s4 = sld [smem:[#allocation0]]
  $region22: #{tpu_custom_call.1} parent=0
    _
  %s6 = ssub.s32 1, %s4
  %s7 = scalar_select 0, %s6, %s4
  $region1: #{tpu_custom_call.1} parent=0
    #allocation2 [shape = 'u8[8192]{0}', space=vmem, size = 0x2000, scoped, tag = 'output window, operand 0, single buffered']
    #allocation3 [shape = 's32[1]{0}', space=sflag, size = 0x4, scoped, tag = 'scoped memory for tpu_custom_call.1']
    %8 = vsyncpa [#allocation3], 0
    // Predicated region
    $region2: #{tpu_custom_call.1} parent=1 // pred_check
      _
    $region3: #{tpu_custom_call.1} parent=1 // pred_check_branch
      %10 = sbr.rel (0) target = $region5
    $region4: #{tpu_custom_call.1} parent=1 // pred_region
      _
    $region5: #{tpu_custom_call.1} parent=1 // pred_fallthru
      _
    // Predicated region
    $region6: #{tpu_custom_call.1} parent=1 // pred_check
      _
    $region7: #{tpu_custom_call.1} parent=1 // pred_check_branch
      %12 = sbr.rel (0) target = $region9
    $region8: #{tpu_custom_call.1} parent=1 // pred_region
      _
    $region9: #{tpu_custom_call.1} parent=1 // pred_fallthru
      _
    // Predicated region
    $region10: #{tpu_custom_call.1} parent=1 // pred_check
      _
    $region11: #{tpu_custom_call.1} parent=1 // pred_check_branch
      %14 = sbr.rel (0) target = $region13
    $region12: #{tpu_custom_call.1} parent=1 // pred_region
      _
    $region13: #{tpu_custom_call.1} parent=1 // pred_fallthru
      _
    %v16 = vld [vmem:[%s0] sm:$0xff]
    %v17 = vld [vmem:[%s0 + $0x8] sm:$0xff]
    %v18 = vld [vmem:[%s0 + $0x10] sm:$0xff]
    %v19 = vld [vmem:[%s0 + $0x18] sm:$0xff]
    %v20 = vld [vmem:[%s0 + $0x20] sm:$0xff]
    %v21 = vld [vmem:[%s0 + $0x28] sm:$0xff]
    %v22 = vpack.c.bf16 %v17, %v16
    %v23 = vpack.c.bf16 %v19, %v18
    %v24 = vpack.c.bf16 %v21, %v20
    %v25 = vld [vmem:[%s1] sm:$0xf]
    %v26 = vld [vmem:[%s1 + $0x4] sm:$0xf]
    %v27 = vld [vmem:[%s1 + $0x8] sm:$0xf]
    %v28 = vld [vmem:[%s1 + $0xc] sm:$0xf]
    %v33 = vunpack.c.l.b16 %v25
    %v34 = vunpack.c.l.b16 %v26
    %v35 = vunpack.c.l.b16 %v27
    %v36 = vunpack.c.l.b16 %v28
    %v37 = vpack.c.b16 %v34, %v33
    %v38 = vpack.c.b16 %v36, %v35
    %vm41 = vcmask 261120
    %v43 = vsel %vm41, %v22, 0
    %v46 = vsel %vm41, %v23, 0
    %v49 = vsel %vm41, %v24, 0
    %51 = vmatpush.bf16.msra.mxu0 0
    %52 = vmatpush.bf16.msra.mxu0 0
    %53 = vmatpush.bf16.msra.mxu0 0
    %54 = vmatpush.bf16.msra.mxu0 0
    %55 = vmatpush.bf16.msra.mxu0 0
    %56 = vmatpush.bf16.msra.mxu0 0
    %57 = vmatpush.bf16.msra.mxu0 %v38
    %58 = vmatpush.bf16.msra.mxu0 %v37
    %59 = vmatmul.bf16.gmra.mxu0 %v43
    %v60 = vpop.f32.mrf.mxu0
    %v61 = vadd.f32 0.0, %v60
    %v62 = vpop.f32.mrf.mxu0
    %v63 = vadd.f32 0.0, %v62
    %64 = vmatmul.bf16.gmra.mxu0 %v46
    %v65 = vpop.f32.mrf.mxu0
    %v66 = vadd.f32 0.0, %v65
    %v67 = vpop.f32.mrf.mxu0
    %v68 = vadd.f32 0.0, %v67
    %69 = vmatmul.bf16.gmra.mxu0 %v49
    %v70 = vpop.f32.mrf.mxu0
    %v71 = vadd.f32 0.0, %v70
    %v72 = vpop.f32.mrf.mxu0
    %v73 = vadd.f32 0.0, %v72
    %74 = vdwg.mxu0
    %v75 = vld [vmem:[%s2] sm:$0x1]
    %v76 = vperm.slane %v75, 0
    %v77 = vadd.f32 %v61, %v76
    %v78 = vadd.f32 %v63, %v76
    %v79 = vld [vmem:[%s2 + $0x1] sm:$0x1]
    %v80 = vperm.slane %v79, 0
    %82 = vrot.lane.b32.xlu0 %v80, 32
    %v83 = vpop.permute.xlu0 %82
    %v85 = vadd.f32 %v66, %v83
    %v86 = vadd.f32 %v68, %v83
    %v87 = vld [vmem:[%s2 + $0x2] sm:$0x1]
    %v88 = vperm.slane %v87, 0
    %90 = vrot.lane.b32.xlu0 %v88, 64
    %v91 = vpop.permute.xlu0 %90
    %v93 = vadd.f32 %v71, %v91
    %v94 = vadd.f32 %v73, %v91
    %v95 = vld [vmem:[%s2 + $0x48] sm:$0xff]
    %v96 = vld [vmem:[%s2 + $0x50] sm:$0xff]
    %v97 = vld [vmem:[%s2 + $0x58] sm:$0xff]
    %v98 = vld [vmem:[%s2 + $0x60] sm:$0xff]
    %v99 = vld [vmem:[%s2 + $0x68] sm:$0xff]
    %v100 = vld [vmem:[%s2 + $0x70] sm:$0xff]
    %v101 = vld [vmem:[%s2 + $0x78] sm:$0xff]
    %v102 = vld [vmem:[%s2 + $0x80] sm:$0xff]
    %v103 = vld [vmem:[%s2 + $0x8] sm:$0xff]
    %v104 = vld [vmem:[%s2 + $0x10] sm:$0xff]
    %v105 = vld [vmem:[%s2 + $0x18] sm:$0xff]
    %v106 = vld [vmem:[%s2 + $0x20] sm:$0xff]
    %v107 = vld [vmem:[%s2 + $0x28] sm:$0xff]
    %v108 = vld [vmem:[%s2 + $0x30] sm:$0xff]
    %v109 = vld [vmem:[%s2 + $0x38] sm:$0xff]
    %v110 = vld [vmem:[%s2 + $0x40] sm:$0xff]
    %119 = vrot.lane.b32.xlu0 %v95, 32
    %v120 = vpop.permute.xlu0 %119
    %121 = vrot.lane.b32.xlu0 %v96, 32
    %v122 = vpop.permute.xlu0 %121
    %123 = vrot.lane.b32.xlu0 %v97, 32
    %v124 = vpop.permute.xlu0 %123
    %125 = vrot.lane.b32.xlu0 %v98, 32
    %v126 = vpop.permute.xlu0 %125
    %127 = vrot.lane.b32.xlu0 %v99, 32
    %v128 = vpop.permute.xlu0 %127
    %129 = vrot.lane.b32.xlu0 %v100, 32
    %v130 = vpop.permute.xlu0 %129
    %131 = vrot.lane.b32.xlu0 %v101, 32
    %v132 = vpop.permute.xlu0 %131
    %133 = vrot.lane.b32.xlu0 %v102, 32
    %v134 = vpop.permute.xlu0 %133
    %v143 = vmul.f32 %v85, %v120
    %v144 = vmul.f32 %v86, %v122
    %v145 = vmul.f32 %v85, %v124
    %v146 = vmul.f32 %v86, %v126
    %v147 = vmul.f32 %v85, %v128
    %v148 = vmul.f32 %v86, %v130
    %v149 = vmul.f32 %v85, %v132
    %v150 = vmul.f32 %v86, %v134
    %151 = vrot.lane.b32.xlu0 %v95, 64
    %v152 = vpop.permute.xlu0 %151
    %153 = vrot.lane.b32.xlu0 %v96, 64
    %v154 = vpop.permute.xlu0 %153
    %155 = vrot.lane.b32.xlu0 %v97, 64
    %v156 = vpop.permute.xlu0 %155
    %157 = vrot.lane.b32.xlu0 %v98, 64
    %v158 = vpop.permute.xlu0 %157
    %159 = vrot.lane.b32.xlu0 %v99, 64
    %v160 = vpop.permute.xlu0 %159
    %161 = vrot.lane.b32.xlu0 %v100, 64
    %v162 = vpop.permute.xlu0 %161
    %163 = vrot.lane.b32.xlu0 %v101, 64
    %v164 = vpop.permute.xlu0 %163
    %165 = vrot.lane.b32.xlu0 %v102, 64
    %v166 = vpop.permute.xlu0 %165
    %v175 = vmul.f32 %v93, %v152
    %v176 = vmul.f32 %v94, %v154
    %v177 = vmul.f32 %v93, %v156
    %v178 = vmul.f32 %v94, %v158
    %v179 = vmul.f32 %v93, %v160
    %v180 = vmul.f32 %v94, %v162
    %v181 = vmul.f32 %v93, %v164
    %v182 = vmul.f32 %v94, %v166
    %v183 = vpack.c.bf16 %v78, %v77
    %v184 = vpack.c.bf16 %v144, %v143
    %v185 = vpack.c.bf16 %v146, %v145
    %v186 = vpack.c.bf16 %v148, %v147
    %v187 = vpack.c.bf16 %v150, %v149
    %192 = vrot.lane.b32.xlu0 %v184, 96
    %v193 = vpop.permute.xlu0 %192
    %194 = vrot.lane.b32.xlu0 %v185, 96
    %v195 = vpop.permute.xlu0 %194
    %196 = vrot.lane.b32.xlu0 %v186, 96
    %v197 = vpop.permute.xlu0 %196
    %198 = vrot.lane.b32.xlu0 %v187, 96
    %v199 = vpop.permute.xlu0 %198
    %v201 = vsel %vm41, %v183, 0
    %v204 = vsel %vm41, %v193, 0
    %v207 = vsel %vm41, %v195, 0
    %v210 = vsel %vm41, %v197, 0
    %v213 = vsel %vm41, %v199, 0
    %215 = vmatpush.bf16.xpose.msra.mxu0 0
    %216 = vmatpush.bf16.xpose.msra.mxu0 0
    %217 = vmatpush.bf16.xpose.msra.mxu0 0
    %218 = vmatpush.bf16.xpose.msra.mxu0 0
    %219 = vmatpush.bf16.xpose.msra.mxu0 %v213
    %220 = vmatpush.bf16.xpose.msra.mxu0 %v210
    %221 = vmatpush.bf16.xpose.msra.mxu0 %v207
    %222 = vmatpush.bf16.xpose.msra.mxu0 %v204
    %223 = vmatmul.bf16.gmra.mxu0 %v201
    %v224 = vpop.f32.mrf.mxu0
    %v225 = vadd.f32 %v103, %v224
    %v226 = vpop.f32.mrf.mxu0
    %v227 = vadd.f32 %v104, %v226
    %228 = vmatmul.bf16.gmra.mxu0 %v201
    %v229 = vpop.f32.mrf.mxu0
    %v230 = vadd.f32 %v105, %v229
    %v231 = vpop.f32.mrf.mxu0
    %v232 = vadd.f32 %v106, %v231
    %233 = vmatmul.bf16.gmra.mxu0 %v201
    %v234 = vpop.f32.mrf.mxu0
    %v235 = vadd.f32 %v107, %v234
    %v236 = vpop.f32.mrf.mxu0
    %v237 = vadd.f32 %v108, %v236
    %238 = vmatmul.bf16.gmra.mxu0 %v201
    %v239 = vpop.f32.mrf.mxu0
    %v240 = vadd.f32 %v109, %v239
    %v241 = vpop.f32.mrf.mxu0
    %v242 = vadd.f32 %v110, %v241
    %243 = vdwg.mxu0
    %vm244 = vcmask 523264
    %v245 = vsel %vm244, %v225, -inf
    %246 = vmax.xlane.f32.xlu0 %v245
    %v247 = vpop.xlane.xlu0 %246
    %v248 = vsel %vm244, %v227, -inf
    %249 = vmax.xlane.f32.xlu0 %v248
    %v250 = vpop.xlane.xlu0 %249
    %v251 = vsel %vm244, %v230, -inf
    %252 = vmax.xlane.f32.xlu0 %v251
    %v253 = vpop.xlane.xlu0 %252
    %v254 = vsel %vm244, %v232, -inf
    %255 = vmax.xlane.f32.xlu0 %v254
    %v256 = vpop.xlane.xlu0 %255
    %v257 = vsel %vm244, %v235, -inf
    %258 = vmax.xlane.f32.xlu0 %v257
    %v259 = vpop.xlane.xlu0 %258
    %v260 = vsel %vm244, %v237, -inf
    %261 = vmax.xlane.f32.xlu0 %v260
    %v262 = vpop.xlane.xlu0 %261
    %v263 = vsel %vm244, %v240, -inf
    %264 = vmax.xlane.f32.xlu0 %v263
    %v265 = vpop.xlane.xlu0 %264
    %v266 = vsel %vm244, %v242, -inf
    %267 = vmax.xlane.f32.xlu0 %v266
    %v268 = vpop.xlane.xlu0 %267
    %v269 = vsub.f32 %v225, %v247
    %v270 = vsub.f32 %v227, %v250
    %v271 = vsub.f32 %v230, %v253
    %v272 = vsub.f32 %v232, %v256
    %v273 = vsub.f32 %v235, %v259
    %v274 = vsub.f32 %v237, %v262
    %v275 = vsub.f32 %v240, %v265
    %v276 = vsub.f32 %v242, %v268
    %v277 = vmul.f32 %v269, 1.442695
    %v278 = vpow.pop %v277
    %v279 = vmul.f32 %v270, 1.442695
    %v280 = vpow.pop %v279
    %v281 = vmul.f32 %v271, 1.442695
    %v282 = vpow.pop %v281
    %v283 = vmul.f32 %v272, 1.442695
    %v284 = vpow.pop %v283
    %v285 = vmul.f32 %v273, 1.442695
    %v286 = vpow.pop %v285
    %v287 = vmul.f32 %v274, 1.442695
    %v288 = vpow.pop %v287
    %v289 = vmul.f32 %v275, 1.442695
    %v290 = vpow.pop %v289
    %v291 = vmul.f32 %v276, 1.442695
    %v292 = vpow.pop %v291
    %v293 = vsel %vm244, %v278, 0.0
    %294 = vadd.xlane.f32.xlu0 %v293
    %v295 = vpop.xlane.xlu0 %294
    %v296 = vsel %vm244, %v280, 0.0
    %297 = vadd.xlane.f32.xlu0 %v296
    %v298 = vpop.xlane.xlu0 %297
    %v299 = vsel %vm244, %v282, 0.0
    %300 = vadd.xlane.f32.xlu0 %v299
    %v301 = vpop.xlane.xlu0 %300
    %v302 = vsel %vm244, %v284, 0.0
    %303 = vadd.xlane.f32.xlu0 %v302
    %v304 = vpop.xlane.xlu0 %303
    %v305 = vsel %vm244, %v286, 0.0
    %306 = vadd.xlane.f32.xlu0 %v305
    %v307 = vpop.xlane.xlu0 %306
    %v308 = vsel %vm244, %v288, 0.0
    %309 = vadd.xlane.f32.xlu0 %v308
    %v310 = vpop.xlane.xlu0 %309
    %v311 = vsel %vm244, %v290, 0.0
    %312 = vadd.xlane.f32.xlu0 %v311
    %v313 = vpop.xlane.xlu0 %312
    %v314 = vsel %vm244, %v292, 0.0
    %315 = vadd.xlane.f32.xlu0 %v314
    %v316 = vpop.xlane.xlu0 %315
    %v317 = vrcp.pop %v295
    %v318 = vrcp.pop %v298
    %v319 = vrcp.pop %v301
    %v320 = vrcp.pop %v304
    %v321 = vrcp.pop %v307
    %v322 = vrcp.pop %v310
    %v323 = vrcp.pop %v313
    %v324 = vrcp.pop %v316
    %v325 = vmul.f32 %v278, %v317
    %v326 = vmul.f32 %v280, %v318
    %v327 = vmul.f32 %v282, %v319
    %v328 = vmul.f32 %v284, %v320
    %v329 = vmul.f32 %v286, %v321
    %v330 = vmul.f32 %v288, %v322
    %v331 = vmul.f32 %v290, %v323
    %v332 = vmul.f32 %v292, %v324
    %v333 = vpack.c.bf16 %v326, %v325
    %v334 = vpack.c.bf16 %v328, %v327
    %v335 = vpack.c.bf16 %v330, %v329
    %v336 = vpack.c.bf16 %v332, %v331
    %v337 = vpack.c.bf16 %v176, %v175
    %v338 = vpack.c.bf16 %v178, %v177
    %v339 = vpack.c.bf16 %v180, %v179
    %v340 = vpack.c.bf16 %v182, %v181
    %345 = vrot.lane.b32.xlu0 %v337, 64
    %v346 = vpop.permute.xlu0 %345
    %347 = vrot.lane.b32.xlu0 %v338, 64
    %v348 = vpop.permute.xlu0 %347
    %349 = vrot.lane.b32.xlu0 %v339, 64
    %v350 = vpop.permute.xlu0 %349
    %351 = vrot.lane.b32.xlu0 %v340, 64
    %v352 = vpop.permute.xlu0 %351
    %v358 = vsel %vm244, %v333, 0
    %v361 = vsel %vm244, %v334, 0
    %v364 = vsel %vm244, %v335, 0
    %v367 = vsel %vm244, %v336, 0
    %369 = vmatpush.bf16.msra.mxu0 0
    %370 = vmatpush.bf16.msra.mxu0 0
    %371 = vmatpush.bf16.msra.mxu0 0
    %372 = vmatpush.bf16.msra.mxu0 0
    %373 = vmatpush.bf16.msra.mxu0 %v352
    %374 = vmatpush.bf16.msra.mxu0 %v350
    %375 = vmatpush.bf16.msra.mxu0 %v348
    %376 = vmatpush.bf16.msra.mxu0 %v346
    %377 = vmatmul.bf16.gmra.mxu0 %v358
    %v378 = vpop.f32.mrf.mxu0
    %v379 = vadd.f32 0.0, %v378
    %v380 = vpop.f32.mrf.mxu0
    %v381 = vadd.f32 0.0, %v380
    %382 = vmatmul.bf16.gmra.mxu0 %v361
    %v383 = vpop.f32.mrf.mxu0
    %v384 = vadd.f32 0.0, %v383
    %v385 = vpop.f32.mrf.mxu0
    %v386 = vadd.f32 0.0, %v385
    %387 = vmatmul.bf16.gmra.mxu0 %v364
    %v388 = vpop.f32.mrf.mxu0
    %v389 = vadd.f32 0.0, %v388
    %v390 = vpop.f32.mrf.mxu0
    %v391 = vadd.f32 0.0, %v390
    %392 = vmatmul.bf16.gmra.mxu0 %v367
    %v393 = vpop.f32.mrf.mxu0
    %v394 = vadd.f32 0.0, %v393
    %v395 = vpop.f32.mrf.mxu0
    %v396 = vadd.f32 0.0, %v395
    %397 = vdwg.mxu0
    %v398 = vsel %vm41, %v379, 0.0
    %v399 = vsel %vm41, %v384, 0.0
    %v400 = vadd.f32 %v398, %v399
    %v401 = vsel %vm41, %v389, 0.0
    %v402 = vadd.f32 %v400, %v401
    %v403 = vsel %vm41, %v394, 0.0
    %v404 = vadd.f32 %v402, %v403
    %v405 = vsel %vm41, %v381, 0.0
    %v406 = vsel %vm41, %v386, 0.0
    %v407 = vadd.f32 %v405, %v406
    %v408 = vsel %vm41, %v391, 0.0
    %v409 = vadd.f32 %v407, %v408
    %v410 = vsel %vm41, %v396, 0.0
    %v411 = vadd.f32 %v409, %v410
    %v412 = vld [vmem:[%s1 + $0x10] sm:$0xf]
    %v413 = vld [vmem:[%s1 + $0x14] sm:$0xf]
    %v414 = vld [vmem:[%s1 + $0x18] sm:$0xf]
    %v415 = vld [vmem:[%s1 + $0x1c] sm:$0xf]
    %v416 = vpack.c.bf16 %v411, %v404
    %v417 = vld [vmem:[%s2 + $0x3] sm:$0x1]
    %v418 = vperm.slane %v417, 0
    %v423 = vunpack.c.l.b16 %v412
    %v424 = vunpack.c.l.b16 %v413
    %v425 = vunpack.c.l.b16 %v414
    %v426 = vunpack.c.l.b16 %v415
    %v427 = vpack.c.b16 %v424, %v423
    %v428 = vpack.c.b16 %v426, %v425
    %v432 = vsel %vm41, %v416, 0
    %434 = vmatpush.bf16.msra.mxu0 0
    %435 = vmatpush.bf16.msra.mxu0 0
    %436 = vmatpush.bf16.msra.mxu0 0
    %437 = vmatpush.bf16.msra.mxu0 0
    %438 = vmatpush.bf16.msra.mxu0 0
    %439 = vmatpush.bf16.msra.mxu0 0
    %440 = vmatpush.bf16.msra.mxu0 %v428
    %441 = vmatpush.bf16.msra.mxu0 %v427
    %442 = vmatmul.bf16.gmra.mxu0 %v432
    %v443 = vpop.f32.mrf.mxu0
    %v444 = vadd.f32 %v418, %v443
    %v445 = vpop.f32.mrf.mxu0
    %v446 = vadd.f32 %v418, %v445
    %447 = vdwg.mxu0
    %v448 = vadd.f32 %v444, %v16
    %v449 = vadd.f32 %v446, %v17
    %v450 = vld [vmem:[%s1 + $0x20] sm:$0xf]
    %v451 = vld [vmem:[%s1 + $0x24] sm:$0xf]
    %v452 = vld [vmem:[%s1 + $0x28] sm:$0xf]
    %v453 = vld [vmem:[%s1 + $0x2c] sm:$0xf]
    %v454 = vld [vmem:[%s1 + $0x30] sm:$0xf]
    %v455 = vld [vmem:[%s1 + $0x34] sm:$0xf]
    %v456 = vld [vmem:[%s1 + $0x38] sm:$0xf]
    %v457 = vld [vmem:[%s1 + $0x3c] sm:$0xf]
    %v458 = vld [vmem:[%s1 + $0x40] sm:$0xf]
    %v459 = vld [vmem:[%s1 + $0x44] sm:$0xf]
    %v460 = vld [vmem:[%s1 + $0x48] sm:$0xf]
    %v461 = vld [vmem:[%s1 + $0x4c] sm:$0xf]
    %v462 = vpack.c.bf16 %v449, %v448
    %v463 = vld [vmem:[%s2 + $0x4] sm:$0x1]
    %v464 = vperm.slane %v463, 0
    %v469 = vunpack.c.l.b16 %v450
    %v470 = vunpack.c.l.b16 %v451
    %v471 = vunpack.c.l.b16 %v452
    %v472 = vunpack.c.l.b16 %v453
    %v473 = vpack.c.b16 %v470, %v469
    %v474 = vpack.c.b16 %v472, %v471
    %v478 = vsel %vm41, %v462, 0
    %480 = vmatpush.bf16.msra.mxu0 0
    %481 = vmatpush.bf16.msra.mxu0 0
    %482 = vmatpush.bf16.msra.mxu0 0
    %483 = vmatpush.bf16.msra.mxu0 0
    %484 = vmatpush.bf16.msra.mxu0 0
    %485 = vmatpush.bf16.msra.mxu0 0
    %486 = vmatpush.bf16.msra.mxu0 %v474
    %487 = vmatpush.bf16.msra.mxu0 %v473
    %488 = vmatmul.bf16.gmra.mxu0 %v478
    %v489 = vpop.f32.mrf.mxu0
    %v490 = vadd.f32 %v464, %v489
    %v491 = vpop.f32.mrf.mxu0
    %v492 = vadd.f32 %v464, %v491
    %493 = vdwg.mxu0
    %v494 = vmul.f32 %v490, 0.5
    %v495 = vmul.f32 %v492, 0.5
    %v496 = vmul.f32 %v490, %v490
    %v497 = vmul.f32 %v492, %v492
    %v498 = vmul.f32 %v496, %v490
    %v499 = vmul.f32 %v497, %v492
    %v500 = vmul.f32 %v498, 0.044715
    %v501 = vmul.f32 %v499, 0.044715
    %v502 = vadd.f32 %v490, %v500
    %v503 = vadd.f32 %v492, %v501
    %v504 = vmul.f32 %v502, 0.7978846
    %v505 = vmul.f32 %v503, 0.7978846
    %v506 = vtanh.pop %v504
    %v507 = vtanh.pop %v505
    %v508 = vadd.f32 %v506, 1.0
    %v509 = vadd.f32 %v507, 1.0
    %v510 = vmul.f32 %v494, %v508
    %v511 = vmul.f32 %v495, %v509
    %v512 = vpack.c.bf16 %v511, %v510
    %v513 = vld [vmem:[%s2 + $0x5] sm:$0x1]
    %v514 = vperm.slane %v513, 0
    %v523 = vunpack.c.l.b16 %v454
    %v524 = vunpack.c.l.b16 %v455
    %v525 = vunpack.c.l.b16 %v456
    %v526 = vunpack.c.l.b16 %v457
    %v527 = vunpack.c.l.b16 %v458
    %v528 = vunpack.c.l.b16 %v459
    %v529 = vunpack.c.l.b16 %v460
    %v530 = vunpack.c.l.b16 %v461
    %v531 = vpack.c.b16 %v524, %v523
    %v532 = vpack.c.b16 %v526, %v525
    %v533 = vpack.c.b16 %v528, %v527
    %v534 = vpack.c.b16 %v530, %v529
    %v540 = vsel %vm244, %v512, 0
    %542 = vmatpush.bf16.msra.mxu0 0
    %543 = vmatpush.bf16.msra.mxu0 0
    %544 = vmatpush.bf16.msra.mxu0 0
    %545 = vmatpush.bf16.msra.mxu0 0
    %546 = vmatpush.bf16.msra.mxu0 %v534
    %547 = vmatpush.bf16.msra.mxu0 %v533
    %548 = vmatpush.bf16.msra.mxu0 %v532
    %549 = vmatpush.bf16.msra.mxu0 %v531
    %550 = vmatmul.bf16.gmra.mxu0 %v540
    %v551 = vpop.f32.mrf.mxu0
    %v552 = vadd.f32 %v514, %v551
    %v553 = vpop.f32.mrf.mxu0
    %v554 = vadd.f32 %v514, %v553
    %555 = vdwg.mxu0
    %v556 = vadd.f32 %v552, %v448
    %v557 = vadd.f32 %v554, %v449
    %v558 = vsel %vm41, %v556, 0.0
    %559 = vadd.xlane.f32.xlu0 %v558
    %v560 = vpop.xlane.xlu0 %559
    %v561 = vsel %vm41, %v557, 0.0
    %562 = vadd.xlane.f32.xlu0 %v561
    %v563 = vpop.xlane.xlu0 %562
    %v564 = vrcp.pop 32.0
    %v565 = vmul.f32 32.0, %v564
    %v566 = vsub.f32 1.0, %v565
    %v567 = vmul.f32 %v564, %v566
    %v568 = vadd.f32 %v564, %v567
    %vm569 = vweird.f32 %v564
    %v570 = vsel %vm569, %v564, %v568
    %v571 = vmul.f32 %v560, %v570
    %v572 = vmul.f32 %v563, %v570
    %v573 = vsub.f32 %v556, %v571
    %v574 = vsub.f32 %v557, %v572
    %v575 = vmul.f32 %v573, %v573
    %v576 = vmul.f32 %v574, %v574
    %v577 = vsel %vm41, %v575, 0.0
    %578 = vadd.xlane.f32.xlu0 %v577
    %v579 = vpop.xlane.xlu0 %578
    %v580 = vsel %vm41, %v576, 0.0
    %581 = vadd.xlane.f32.xlu0 %v580
    %v582 = vpop.xlane.xlu0 %581
    %v583 = vmul.f32 %v579, %v570
    %v584 = vmul.f32 %v582, %v570
    %v585 = vadd.f32 %v583, 1e-05
    %v586 = vadd.f32 %v584, 1e-05
    %v587 = vrsqrt.pop %v585
    %v588 = vmul.f32 %v587, %v585
    %v589 = vmul.f32 %v588, %v587
    %v590 = vmul.f32 0.5, %v589
    %v591 = vsub.f32 1.5, %v590
    %v592 = vmul.f32 %v587, %v591
    %vm593 = vweird.f32 %v585
    %vm594 = vweird.f32 %v587
    %vm595 = vmor %vm593, %vm594
    %v596 = vsel %vm595, %v587, %v592
    %v597 = vrsqrt.pop %v586
    %v598 = vmul.f32 %v597, %v586
    %v599 = vmul.f32 %v598, %v597
    %v600 = vmul.f32 0.5, %v599
    %v601 = vsub.f32 1.5, %v600
    %v602 = vmul.f32 %v597, %v601
    %vm603 = vweird.f32 %v586
    %vm604 = vweird.f32 %v597
    %vm605 = vmor %vm603, %vm604
    %v606 = vsel %vm605, %v597, %v602
    %v607 = vmul.f32 %v573, %v596
    %v608 = vmul.f32 %v574, %v606
    %v609 = vld [vmem:[%s2 + $0x6] sm:$0x1]
    %v610 = vperm.slane %v609, 0
    %v611 = vmul.f32 %v607, %v610
    %v612 = vmul.f32 %v608, %v610
    %v613 = vld [vmem:[%s2 + $0x7] sm:$0x1]
    %v614 = vperm.slane %v613, 0
    %v615 = vadd.f32 %v611, %v614
    %v616 = vadd.f32 %v612, %v614
    %617 = vst.msk [vmem:[#allocation2] sm:$0xff] %vm41, %v615
    %618 = vst.msk [vmem:[#allocation2 + $0x8] sm:$0xff] %vm41, %v616
    // Predicated region
    $region14: #{tpu_custom_call.1} parent=1 // pred_check
      _
    $region15: #{tpu_custom_call.1} parent=1 // pred_check_branch
      %620 = sbr.rel (0) target = $region17
    $region16: #{tpu_custom_call.1} parent=1 // pred_region
      %622 = vsyncadd [#allocation3], 0
      %s623 = sshll.u32 [#allocation2], 4
      %s624 = int_to_ptr.vmem [resolvable:$true] %s623
      %s625 = sshll.u32 %s3, 4
      %s626 = int_to_ptr.hbm [resolvable:$true] %s625
      %631 = dma.vmem_to_hbm [thread:$0]  %s624, 256, %s626, [#allocation3], 128, 128, 8
    $region17: #{tpu_custom_call.1} parent=1 // pred_fallthru
      _
    // Predicated region
    $region18: #{tpu_custom_call.1} parent=1 // pred_check
      _
    $region19: #{tpu_custom_call.1} parent=1 // pred_check_branch
      %633 = sbr.rel (0) target = $region21
    $region20: #{tpu_custom_call.1} parent=1 // pred_region
      %635 = dma.done [#allocation3], 256
    $region21: #{tpu_custom_call.1} parent=1 // pred_fallthru
      _
    %636 = vsyncpa [#allocation3], 1

</llo_original>
